<compile_context>
chip_gen: v5e
topology: v5e:2x2
jax: 0.10.0
libtpu: 0.0.40
codegen_flags: <defaults>
</compile_context>

<pallas_src>
import functools
import math

import jax
import jax.numpy as jnp
from jax.experimental import pallas as pl
from jax.experimental.pallas import tpu as pltpu

RAD2DEG = 180.0 / math.pi

_TAN_PI_8 = 0.4142135623730951      # tan(pi/8)
_TAN_3PI_8 = 2.414213562373095      # tan(3*pi/8)
_PI = math.pi
_PI_2 = math.pi / 2.0
_PI_4 = math.pi / 4.0


# ----------------------------------------------------------------------------
# In-kernel math helper (only +,-,*,/,abs,compare,select -> always lowers)
# ----------------------------------------------------------------------------
def _atan2(y, x):
    """Full-quadrant atan2 (matches jnp.arctan2), one exact divide per call.

    Cephes atanf argument reduction expressed on (|y|, |x|) so the y/x divide
    and the branch divides collapse into a single num/den division.
    """
    a = jnp.abs(y)
    b = jnp.abs(x)
    big = a > _TAN_3PI_8 * b          # |y/x| > tan(3pi/8)
    mid = a > _TAN_PI_8 * b           # |y/x| > tan(pi/8)
    num = jnp.where(big, -b, jnp.where(mid, a - b, a))
    den = jnp.where(big, a, jnp.where(mid, a + b, b))
    den = jnp.where(den == 0.0, 1.0, den)      # only hit when y == x == 0
    t = num / den                               # single exact divide
    y0 = jnp.where(big, _PI_2, jnp.where(mid, _PI_4, 0.0))
    z = t * t
    p = ((8.05374449538e-2 * z - 1.38776856032e-1) * z
         + 1.99777106478e-1) * z - 3.33329491539e-1
    phi = y0 + p * z * t + t                    # atan(|y|/|x|) in [0, pi/2]
    res = jnp.where(x < 0.0, _PI - phi, phi)    # quadrant fixup
    return jnp.where(y < 0.0, -res, res)


# ----------------------------------------------------------------------------
# Fused Pallas kernel: pose conversion + diffs + fused reduction + weighting
# ----------------------------------------------------------------------------
def _pose_loss_kernel(params_ref, gt_ref, out_ref, acc_ref, *,
                      w_trans, w_rot, use_l1, degrees, canonical_pred, inv_b):
    params = params_ref[...]     # (6, Bpad)  f32, batch on lanes
    gt = gt_ref[...]             # (16, Bpad) f32, row-major-flattened 4x4, batch on lanes

    # --- translation diffs: per-component (1, Bpad) sublane rows -------------
    dt0 = params[0:1, :] - gt[3:4, :]
    dt1 = params[1:2, :] - gt[7:8, :]
    dt2 = params[2:3, :] - gt[11:12, :]
    trans_sq = dt0 * dt0 + dt1 * dt1 + dt2 * dt2
    trans_ab = jnp.abs(dt0) + jnp.abs(dt1) + jnp.abs(dt2)

    # --- ground-truth euler angles from the rotation block -------------------
    g00, g10 = gt[0:1, :], gt[4:5, :]
    g20, g21, g22 = gt[8:9, :], gt[9:10, :], gt[10:11, :]
    gt_rx = _atan2(g21, g22)
    gt_ry = _atan2(-g20, jnp.sqrt(g00 * g00 + g10 * g10))
    gt_rz = _atan2(g10, g00)

    # --- predicted euler angles ----------------------------------------------
    rx, ry, rz = params[3:4, :], params[4:5, :], params[5:6, :]
    if degrees and not canonical_pred:
        # euler_pose.from_pose_matrix(pose.build_pose_matrix(params)):
        # build only the rotation entries the extraction needs, then extract.
        cx, sx = jnp.cos(rx), jnp.sin(rx)
        cy, sy = jnp.cos(ry), jnp.sin(ry)
        cz, sz = jnp.cos(rz), jnp.sin(rz)
        pr_rx = _atan2(cy * sx, cy * cx)
        # sqrt((cz*cy)^2 + (sz*cy)^2) == |cy| (exact identity), -p20 == sy
        pr_ry = _atan2(sy, jnp.abs(cy))
        pr_rz = _atan2(sz * cy, cz * cy)
    else:
        pr_rx, pr_ry, pr_rz = rx, ry, rz
    rot_scale = RAD2DEG if degrees else 1.0

    # scale the *difference* once (instead of both operands)
    drx = (pr_rx - gt_rx) * rot_scale
    dry = (pr_ry - gt_ry) * rot_scale
    drz = (pr_rz - gt_rz) * rot_scale
    rot_sq = drx * drx + dry * dry + drz * drz
    rot_ab = jnp.abs(drx) + jnp.abs(dry) + jnp.abs(drz)

    # --- fused epilogue: one cross-lane reduce over an 8-row scratch ---------
    trans_term = trans_ab if use_l1 else trans_sq
    rot_term = rot_ab if use_l1 else rot_sq
    loss_row = trans_term * w_trans + rot_term * w_rot

    acc_ref[...] = jnp.zeros_like(acc_ref)
    acc_ref[0:1, :] = loss_row        # -> loss
    acc_ref[1:2, :] = trans_term      # -> loss_trans
    acc_ref[2:3, :] = rot_term        # -> loss_rot
    acc_ref[3:4, :] = trans_ab        # -> loss_trans_l1
    acc_ref[4:5, :] = rot_ab          # -> loss_rot_l1

    sums = jnp.sum(acc_ref[...], axis=1, keepdims=True) * inv_b   # (8, 1), one reduce
    out_ref[...] = jnp.broadcast_to(sums, (8, 128))               # lane-dense store


def _run_loss_kernel(params_t, gt_t, *, w_trans, w_rot, use_l1, degrees,
                     canonical_pred, b_true):
    b_pad = params_t.shape[1]
    kernel = functools.partial(
        _pose_loss_kernel,
        w_trans=float(w_trans),
        w_rot=float(w_rot),
        use_l1=bool(use_l1),
        degrees=bool(degrees),
        canonical_pred=bool(canonical_pred),
        inv_b=1.0 / float(b_true),
    )
    return pl.pallas_call(
        kernel,
        out_shape=jax.ShapeDtypeStruct((8, 128), jnp.float32),
        in_specs=[
            pl.BlockSpec(memory_space=pltpu.MemorySpace.VMEM),
            pl.BlockSpec(memory_space=pltpu.MemorySpace.VMEM),
        ],
        out_specs=pl.BlockSpec(memory_space=pltpu.MemorySpace.VMEM),
        scratch_shapes=[pltpu.VMEM((8, b_pad), jnp.float32)],
    )(params_t, gt_t)


# ----------------------------------------------------------------------------
# Module-equivalent forward
# ----------------------------------------------------------------------------
def pose_supervision_loss(
    pose_params,
    ground_truth,
    *,
    loss_weights=(1.0, 1.0),
    loss_option="l2",
    loss_degrees=True,
    with_exp_weights=False,
    init_weights=(-3.0, -3.0),
    assume_canonical_prediction=False,
):
    """Mirrors `_PoseSupervisionLossModule.forward` with pose = Pose('euler')."""
    assert loss_option in ("l1", "l2")

    B = pose_params.shape[0]
    b_pad = max(128, ((B + 127) // 128) * 128)

    params = jnp.asarray(pose_params, jnp.float32)
    gt_flat = jnp.asarray(ground_truth, jnp.float32).reshape(B, 16)

    # Transpose batch onto the lane axis and zero-pad to a lane multiple of 128.
    # Zero columns contribute exactly zero to every per-sample loss term.
    params_t = jnp.pad(params.T, ((0, 0), (0, b_pad - B)))     # [6, Bpad]
    gt_t = jnp.pad(gt_flat.T, ((0, 0), (0, b_pad - B)))        # [16, Bpad]

    out = _run_loss_kernel(
        params_t, gt_t,
        w_trans=loss_weights[0],
        w_rot=loss_weights[1],
        use_l1=(loss_option == "l1"),
        degrees=loss_degrees,
        canonical_pred=assume_canonical_prediction,
        b_true=B,
    )
    loss = out[0, 0]
    loss_trans = out[1, 0]
    loss_rot = out[2, 0]
    loss_trans_l1 = out[3, 0]
    loss_rot_l1 = out[4, 0]

    data_dict = {
        "loss_rot": loss_rot,
        "loss_trans": loss_trans,
        "loss_rot_l1": loss_rot_l1,
        "loss_trans_l1": loss_trans_l1,
    }

    if with_exp_weights:
        # ExponentialWeights([loss_trans, loss_rot]); s_param is a learnable
        # module parameter, so it stays outside the kernel (4 scalar ops on
        # kernel outputs).
        s_param = jnp.asarray(init_weights, dtype=jnp.float32)
        loss = (loss_trans * jnp.exp(-s_param[0]) + s_param[0]
                + loss_rot * jnp.exp(-s_param[1]) + s_param[1])
        data_dict["s_trans"] = s_param[0]
        data_dict["s_rot"] = s_param[1]
        data_dict["s_param_trans"] = s_param[0]
        data_dict["s_param_rot"] = s_param[1]
    data_dict["loss"] = loss
    return loss, data_dict


# ----------------------------------------------------------------------------
# Pure-JAX pose glue + reference (verification / test-data construction only)
# ----------------------------------------------------------------------------
def build_pose_matrix(params):
    """params: [B, 6] -> [B, 4, 4] homogeneous pose matrices."""
    t = params[:, :3]
    rx, ry, rz = params[:, 3], params[:, 4], params[:, 5]
    cx, sx = jnp.cos(rx), jnp.sin(rx)
    cy, sy = jnp.cos(ry), jnp.sin(ry)
    cz, sz = jnp.cos(rz), jnp.sin(rz)
    row0 = jnp.stack([cz * cy, cz * sy * sx - sz * cx, cz * sy * cx + sz * sx], axis=-1)
    row1 = jnp.stack([sz * cy, sz * sy * sx + cz * cx, sz * sy * cx - cz * sx], axis=-1)
    row2 = jnp.stack([-sy, cy * sx, cy * cx], axis=-1)
    rot = jnp.stack([row0, row1, row2], axis=-2)                       # [B, 3, 3]
    top = jnp.concatenate([rot, t[:, :, None]], axis=-1)               # [B, 3, 4]
    bottom = jnp.broadcast_to(
        jnp.array([[0.0, 0.0, 0.0, 1.0]], dtype=jnp.float32), (params.shape[0], 1, 4)
    )
    return jnp.concatenate([top, bottom], axis=-2)                     # [B, 4, 4]


def from_pose_matrix(mat):
    """mat: [B, 4, 4] -> [B, 6] params (tx, ty, tz, rx, ry, rz)."""
    t = mat[:, :3, 3]
    r00, r10, r20 = mat[:, 0, 0], mat[:, 1, 0], mat[:, 2, 0]
    r21, r22 = mat[:, 2, 1], mat[:, 2, 2]
    rx = jnp.arctan2(r21, r22)
    ry = jnp.arctan2(-r20, jnp.sqrt(r00 * r00 + r10 * r10))
    rz = jnp.arctan2(r10, r00)
    return jnp.concatenate([t, jnp.stack([rx, ry, rz], axis=-1)], axis=-1)


def _reference_forward(pose_params, ground_truth, loss_weights=(1.0, 1.0),
                       loss_option="l2", loss_degrees=True):
    gt_params = from_pose_matrix(ground_truth)
    if loss_degrees:
        euler_pred = from_pose_matrix(build_pose_matrix(pose_params))
        pred_rot = RAD2DEG * euler_pred[:, 3:]
        gt_rot = RAD2DEG * gt_params[:, 3:]
    else:
        pred_rot = pose_params[:, 3:]
        gt_rot = gt_params[:, 3:]
    dr = pred_rot - gt_rot
    dt = pose_params[:, :3] - gt_params[:, :3]
    loss_rot_l1 = jnp.mean(jnp.sum(jnp.abs(dr), axis=1))
    loss_trans_l1 = jnp.mean(jnp.sum(jnp.abs(dt), axis=1))
    if loss_option == "l1":
        loss_rot = loss_rot_l1
        loss_trans = loss_trans_l1
    else:
        loss_rot = jnp.mean(jnp.sum(dr * dr, axis=1))
        loss_trans = jnp.mean(jnp.sum(dt * dt, axis=1))
    loss = loss_trans * loss_weights[0] + loss_rot * loss_weights[1]
    return {
        "loss": loss,
        "loss_trans": loss_trans,
        "loss_rot": loss_rot,
        "loss_trans_l1": loss_trans_l1,
        "loss_rot_l1": loss_rot_l1,
    }


def _check(tag, data_dict, ref):
    for name in ("loss", "loss_trans", "loss_rot", "loss_trans_l1", "loss_rot_l1"):
        got, want = data_dict[name], ref[name]
        if not jnp.allclose(got, want, rtol=1e-4, atol=1e-4):
            raise AssertionError(f"[{tag}] {name}: kernel={got} reference={want}")


if __name__ == "__main__":
    B = 8
    key = jax.random.PRNGKey(0)
    k1, k2, k3 = jax.random.split(key, 3)

    gt_trans = jax.random.normal(k1, (B, 3), dtype=jnp.float32)
    gt_rot = jax.random.uniform(k2, (B, 3), dtype=jnp.float32, minval=-0.8, maxval=0.8)
    gt_euler_params = jnp.concatenate([gt_trans, gt_rot], axis=1)          # [B, 6]
    ground_truth = build_pose_matrix(gt_euler_params)                      # [B, 4, 4]
    pose_params = gt_euler_params + 0.05 * jax.random.normal(k3, (B, 6), dtype=jnp.float32)

    # default config (l2, degrees)
    loss, dd = pose_supervision_loss(pose_params, ground_truth)
    jax.block_until_ready(loss)
    _check("l2", dd, _reference_forward(pose_params, ground_truth))

    # l1 config
    loss1, dd1 = pose_supervision_loss(pose_params, ground_truth, loss_option="l1")
    jax.block_until_ready(loss1)
    _check("l1", dd1, _reference_forward(pose_params, ground_truth, loss_option="l1"))

    # degrees=False config (raw-radian comparison, gt still extracted)
    loss2, dd2 = pose_supervision_loss(pose_params, ground_truth, loss_degrees=False)
    jax.block_until_ready(loss2)
    _check("rad", dd2, _reference_forward(pose_params, ground_truth, loss_degrees=False))

    # canonical-prediction fast path (valid here: |angles| < pi/2)
    loss3, dd3 = pose_supervision_loss(pose_params, ground_truth,
                                       assume_canonical_prediction=True)
    jax.block_until_ready(loss3)
    _check("canon", dd3, _reference_forward(pose_params, ground_truth))

    print("KERNEL_OK")
</pallas_src>

<mosaic_0001>
module attributes {stable_mosaic.version = 11 : i64} {
  func.func @_pose_loss_kernel(%arg0: memref<6x128xf32, #tpu.memory_space<vmem>>, %arg1: memref<16x128xf32, #tpu.memory_space<vmem>>, %arg2: memref<8x128xf32, #tpu.memory_space<vmem>>, %arg3: memref<8x128xf32, #tpu.memory_space<vmem>>) attributes {dimension_semantics = [], scalar_prefetch = 0 : i64, scratch_operands = 1 : i64, tpu.core_type = #tpu.core_type<tc>} {
    %c0 = arith.constant 0 : index
    %c0_0 = arith.constant 0 : index
    %0 = vector.load %arg0[%c0, %c0_0] : memref<6x128xf32, #tpu.memory_space<vmem>>, vector<6x128xf32>
    %c0_1 = arith.constant 0 : index
    %c0_2 = arith.constant 0 : index
    %1 = vector.load %arg1[%c0_1, %c0_2] : memref<16x128xf32, #tpu.memory_space<vmem>>, vector<16x128xf32>
    %2 = vector.extract_strided_slice %0 {offsets = [0, 0], sizes = [1, 128], strides = [1, 1]} : vector<6x128xf32> to vector<1x128xf32>
    %3 = vector.extract_strided_slice %1 {offsets = [3, 0], sizes = [1, 128], strides = [1, 1]} : vector<16x128xf32> to vector<1x128xf32>
    %4 = arith.subf %2, %3 : vector<1x128xf32>
    %5 = vector.extract_strided_slice %0 {offsets = [1, 0], sizes = [1, 128], strides = [1, 1]} : vector<6x128xf32> to vector<1x128xf32>
    %6 = vector.extract_strided_slice %1 {offsets = [7, 0], sizes = [1, 128], strides = [1, 1]} : vector<16x128xf32> to vector<1x128xf32>
    %7 = arith.subf %5, %6 : vector<1x128xf32>
    %8 = vector.extract_strided_slice %0 {offsets = [2, 0], sizes = [1, 128], strides = [1, 1]} : vector<6x128xf32> to vector<1x128xf32>
    %9 = vector.extract_strided_slice %1 {offsets = [11, 0], sizes = [1, 128], strides = [1, 1]} : vector<16x128xf32> to vector<1x128xf32>
    %10 = arith.subf %8, %9 : vector<1x128xf32>
    %11 = arith.mulf %4, %4 : vector<1x128xf32>
    %12 = arith.mulf %7, %7 : vector<1x128xf32>
    %13 = arith.addf %11, %12 : vector<1x128xf32>
    %14 = arith.mulf %10, %10 : vector<1x128xf32>
    %15 = arith.addf %13, %14 : vector<1x128xf32>
    %16 = math.absf %4 : vector<1x128xf32>
    %17 = math.absf %7 : vector<1x128xf32>
    %18 = arith.addf %16, %17 : vector<1x128xf32>
    %19 = math.absf %10 : vector<1x128xf32>
    %20 = arith.addf %18, %19 : vector<1x128xf32>
    %21 = vector.extract_strided_slice %1 {offsets = [0, 0], sizes = [1, 128], strides = [1, 1]} : vector<16x128xf32> to vector<1x128xf32>
    %22 = vector.extract_strided_slice %1 {offsets = [4, 0], sizes = [1, 128], strides = [1, 1]} : vector<16x128xf32> to vector<1x128xf32>
    %23 = vector.extract_strided_slice %1 {offsets = [8, 0], sizes = [1, 128], strides = [1, 1]} : vector<16x128xf32> to vector<1x128xf32>
    %24 = vector.extract_strided_slice %1 {offsets = [9, 0], sizes = [1, 128], strides = [1, 1]} : vector<16x128xf32> to vector<1x128xf32>
    %25 = vector.extract_strided_slice %1 {offsets = [10, 0], sizes = [1, 128], strides = [1, 1]} : vector<16x128xf32> to vector<1x128xf32>
    %26 = math.absf %24 : vector<1x128xf32>
    %27 = math.absf %25 : vector<1x128xf32>
    %cst = arith.constant 2.41421366 : f32
    %28 = vector.broadcast %cst : f32 to vector<1x128xf32>
    %29 = arith.mulf %28, %27 : vector<1x128xf32>
    %30 = arith.cmpf ogt, %26, %29 : vector<1x128xf32>
    %cst_3 = arith.constant 0.414213568 : f32
    %31 = vector.broadcast %cst_3 : f32 to vector<1x128xf32>
    %32 = arith.mulf %31, %27 : vector<1x128xf32>
    %33 = arith.cmpf ogt, %26, %32 : vector<1x128xf32>
    %cst_4 = arith.constant 0.000000e+00 : f32
    %34 = vector.broadcast %cst_4 : f32 to vector<1x128xf32>
    %35 = arith.subf %34, %27 : vector<1x128xf32>
    %36 = arith.subf %26, %27 : vector<1x128xf32>
    %37 = arith.select %33, %36, %26 : vector<1x128xi1>, vector<1x128xf32>
    %38 = arith.select %30, %35, %37 : vector<1x128xi1>, vector<1x128xf32>
    %39 = arith.addf %26, %27 : vector<1x128xf32>
    %40 = arith.select %33, %39, %27 : vector<1x128xi1>, vector<1x128xf32>
    %41 = arith.select %30, %26, %40 : vector<1x128xi1>, vector<1x128xf32>
    %cst_5 = arith.constant 0.000000e+00 : f32
    %42 = vector.broadcast %cst_5 : f32 to vector<1x128xf32>
    %43 = arith.cmpf oeq, %41, %42 : vector<1x128xf32>
    %cst_6 = arith.constant 1.000000e+00 : f32
    %44 = vector.broadcast %cst_6 : f32 to vector<1x128xf32>
    %45 = arith.select %43, %44, %41 : vector<1x128xi1>, vector<1x128xf32>
    %46 = arith.divf %38, %45 : vector<1x128xf32>
    %cst_7 = arith.constant 0.785398185 : f32
    %cst_8 = arith.constant 0.000000e+00 : f32
    %47 = vector.broadcast %cst_7 : f32 to vector<1x128xf32>
    %48 = vector.broadcast %cst_8 : f32 to vector<1x128xf32>
    %49 = arith.select %33, %47, %48 : vector<1x128xi1>, vector<1x128xf32>
    %cst_9 = arith.constant 1.57079637 : f32
    %50 = vector.broadcast %cst_9 : f32 to vector<1x128xf32>
    %51 = arith.select %30, %50, %49 : vector<1x128xi1>, vector<1x128xf32>
    %52 = arith.mulf %46, %46 : vector<1x128xf32>
    %cst_10 = arith.constant 0.0805374458 : f32
    %53 = vector.broadcast %cst_10 : f32 to vector<1x128xf32>
    %54 = arith.mulf %53, %52 : vector<1x128xf32>
    %cst_11 = arith.constant 0.138776854 : f32
    %55 = vector.broadcast %cst_11 : f32 to vector<1x128xf32>
    %56 = arith.subf %54, %55 : vector<1x128xf32>
    %57 = arith.mulf %56, %52 : vector<1x128xf32>
    %cst_12 = arith.constant 0.199777111 : f32
    %58 = vector.broadcast %cst_12 : f32 to vector<1x128xf32>
    %59 = arith.addf %57, %58 : vector<1x128xf32>
    %60 = arith.mulf %59, %52 : vector<1x128xf32>
    %cst_13 = arith.constant 0.333329499 : f32
    %61 = vector.broadcast %cst_13 : f32 to vector<1x128xf32>
    %62 = arith.subf %60, %61 : vector<1x128xf32>
    %63 = arith.mulf %62, %52 : vector<1x128xf32>
    %64 = arith.mulf %63, %46 : vector<1x128xf32>
    %65 = arith.addf %51, %64 : vector<1x128xf32>
    %66 = arith.addf %65, %46 : vector<1x128xf32>
    %cst_14 = arith.constant 0.000000e+00 : f32
    %67 = vector.broadcast %cst_14 : f32 to vector<1x128xf32>
    %68 = arith.cmpf olt, %25, %67 : vector<1x128xf32>
    %cst_15 = arith.constant 3.14159274 : f32
    %69 = vector.broadcast %cst_15 : f32 to vector<1x128xf32>
    %70 = arith.subf %69, %66 : vector<1x128xf32>
    %71 = arith.select %68, %70, %66 : vector<1x128xi1>, vector<1x128xf32>
    %cst_16 = arith.constant 0.000000e+00 : f32
    %72 = vector.broadcast %cst_16 : f32 to vector<1x128xf32>
    %73 = arith.cmpf olt, %24, %72 : vector<1x128xf32>
    %cst_17 = arith.constant 0.000000e+00 : f32
    %74 = vector.broadcast %cst_17 : f32 to vector<1x128xf32>
    %75 = arith.subf %74, %71 : vector<1x128xf32>
    %76 = arith.select %73, %75, %71 : vector<1x128xi1>, vector<1x128xf32>
    %cst_18 = arith.constant 0.000000e+00 : f32
    %77 = vector.broadcast %cst_18 : f32 to vector<1x128xf32>
    %78 = arith.subf %77, %23 : vector<1x128xf32>
    %79 = arith.mulf %21, %21 : vector<1x128xf32>
    %80 = arith.mulf %22, %22 : vector<1x128xf32>
    %81 = arith.addf %79, %80 : vector<1x128xf32>
    %82 = math.sqrt %81 : vector<1x128xf32>
    %83 = math.absf %78 : vector<1x128xf32>
    %84 = math.absf %82 : vector<1x128xf32>
    %cst_19 = arith.constant 2.41421366 : f32
    %85 = vector.broadcast %cst_19 : f32 to vector<1x128xf32>
    %86 = arith.mulf %85, %84 : vector<1x128xf32>
    %87 = arith.cmpf ogt, %83, %86 : vector<1x128xf32>
    %cst_20 = arith.constant 0.414213568 : f32
    %88 = vector.broadcast %cst_20 : f32 to vector<1x128xf32>
    %89 = arith.mulf %88, %84 : vector<1x128xf32>
    %90 = arith.cmpf ogt, %83, %89 : vector<1x128xf32>
    %cst_21 = arith.constant 0.000000e+00 : f32
    %91 = vector.broadcast %cst_21 : f32 to vector<1x128xf32>
    %92 = arith.subf %91, %84 : vector<1x128xf32>
    %93 = arith.subf %83, %84 : vector<1x128xf32>
    %94 = arith.select %90, %93, %83 : vector<1x128xi1>, vector<1x128xf32>
    %95 = arith.select %87, %92, %94 : vector<1x128xi1>, vector<1x128xf32>
    %96 = arith.addf %83, %84 : vector<1x128xf32>
    %97 = arith.select %90, %96, %84 : vector<1x128xi1>, vector<1x128xf32>
    %98 = arith.select %87, %83, %97 : vector<1x128xi1>, vector<1x128xf32>
    %cst_22 = arith.constant 0.000000e+00 : f32
    %99 = vector.broadcast %cst_22 : f32 to vector<1x128xf32>
    %100 = arith.cmpf oeq, %98, %99 : vector<1x128xf32>
    %cst_23 = arith.constant 1.000000e+00 : f32
    %101 = vector.broadcast %cst_23 : f32 to vector<1x128xf32>
    %102 = arith.select %100, %101, %98 : vector<1x128xi1>, vector<1x128xf32>
    %103 = arith.divf %95, %102 : vector<1x128xf32>
    %cst_24 = arith.constant 0.785398185 : f32
    %cst_25 = arith.constant 0.000000e+00 : f32
    %104 = vector.broadcast %cst_24 : f32 to vector<1x128xf32>
    %105 = vector.broadcast %cst_25 : f32 to vector<1x128xf32>
    %106 = arith.select %90, %104, %105 : vector<1x128xi1>, vector<1x128xf32>
    %cst_26 = arith.constant 1.57079637 : f32
    %107 = vector.broadcast %cst_26 : f32 to vector<1x128xf32>
    %108 = arith.select %87, %107, %106 : vector<1x128xi1>, vector<1x128xf32>
    %109 = arith.mulf %103, %103 : vector<1x128xf32>
    %cst_27 = arith.constant 0.0805374458 : f32
    %110 = vector.broadcast %cst_27 : f32 to vector<1x128xf32>
    %111 = arith.mulf %110, %109 : vector<1x128xf32>
    %cst_28 = arith.constant 0.138776854 : f32
    %112 = vector.broadcast %cst_28 : f32 to vector<1x128xf32>
    %113 = arith.subf %111, %112 : vector<1x128xf32>
    %114 = arith.mulf %113, %109 : vector<1x128xf32>
    %cst_29 = arith.constant 0.199777111 : f32
    %115 = vector.broadcast %cst_29 : f32 to vector<1x128xf32>
    %116 = arith.addf %114, %115 : vector<1x128xf32>
    %117 = arith.mulf %116, %109 : vector<1x128xf32>
    %cst_30 = arith.constant 0.333329499 : f32
    %118 = vector.broadcast %cst_30 : f32 to vector<1x128xf32>
    %119 = arith.subf %117, %118 : vector<1x128xf32>
    %120 = arith.mulf %119, %109 : vector<1x128xf32>
    %121 = arith.mulf %120, %103 : vector<1x128xf32>
    %122 = arith.addf %108, %121 : vector<1x128xf32>
    %123 = arith.addf %122, %103 : vector<1x128xf32>
    %cst_31 = arith.constant 0.000000e+00 : f32
    %124 = vector.broadcast %cst_31 : f32 to vector<1x128xf32>
    %125 = arith.cmpf olt, %82, %124 : vector<1x128xf32>
    %cst_32 = arith.constant 3.14159274 : f32
    %126 = vector.broadcast %cst_32 : f32 to vector<1x128xf32>
    %127 = arith.subf %126, %123 : vector<1x128xf32>
    %128 = arith.select %125, %127, %123 : vector<1x128xi1>, vector<1x128xf32>
    %cst_33 = arith.constant 0.000000e+00 : f32
    %129 = vector.broadcast %cst_33 : f32 to vector<1x128xf32>
    %130 = arith.cmpf olt, %78, %129 : vector<1x128xf32>
    %cst_34 = arith.constant 0.000000e+00 : f32
    %131 = vector.broadcast %cst_34 : f32 to vector<1x128xf32>
    %132 = arith.subf %131, %128 : vector<1x128xf32>
    %133 = arith.select %130, %132, %128 : vector<1x128xi1>, vector<1x128xf32>
    %134 = math.absf %22 : vector<1x128xf32>
    %135 = math.absf %21 : vector<1x128xf32>
    %cst_35 = arith.constant 2.41421366 : f32
    %136 = vector.broadcast %cst_35 : f32 to vector<1x128xf32>
    %137 = arith.mulf %136, %135 : vector<1x128xf32>
    %138 = arith.cmpf ogt, %134, %137 : vector<1x128xf32>
    %cst_36 = arith.constant 0.414213568 : f32
    %139 = vector.broadcast %cst_36 : f32 to vector<1x128xf32>
    %140 = arith.mulf %139, %135 : vector<1x128xf32>
    %141 = arith.cmpf ogt, %134, %140 : vector<1x128xf32>
    %cst_37 = arith.constant 0.000000e+00 : f32
    %142 = vector.broadcast %cst_37 : f32 to vector<1x128xf32>
    %143 = arith.subf %142, %135 : vector<1x128xf32>
    %144 = arith.subf %134, %135 : vector<1x128xf32>
    %145 = arith.select %141, %144, %134 : vector<1x128xi1>, vector<1x128xf32>
    %146 = arith.select %138, %143, %145 : vector<1x128xi1>, vector<1x128xf32>
    %147 = arith.addf %134, %135 : vector<1x128xf32>
    %148 = arith.select %141, %147, %135 : vector<1x128xi1>, vector<1x128xf32>
    %149 = arith.select %138, %134, %148 : vector<1x128xi1>, vector<1x128xf32>
    %cst_38 = arith.constant 0.000000e+00 : f32
    %150 = vector.broadcast %cst_38 : f32 to vector<1x128xf32>
    %151 = arith.cmpf oeq, %149, %150 : vector<1x128xf32>
    %cst_39 = arith.constant 1.000000e+00 : f32
    %152 = vector.broadcast %cst_39 : f32 to vector<1x128xf32>
    %153 = arith.select %151, %152, %149 : vector<1x128xi1>, vector<1x128xf32>
    %154 = arith.divf %146, %153 : vector<1x128xf32>
    %cst_40 = arith.constant 0.785398185 : f32
    %cst_41 = arith.constant 0.000000e+00 : f32
    %155 = vector.broadcast %cst_40 : f32 to vector<1x128xf32>
    %156 = vector.broadcast %cst_41 : f32 to vector<1x128xf32>
    %157 = arith.select %141, %155, %156 : vector<1x128xi1>, vector<1x128xf32>
    %cst_42 = arith.constant 1.57079637 : f32
    %158 = vector.broadcast %cst_42 : f32 to vector<1x128xf32>
    %159 = arith.select %138, %158, %157 : vector<1x128xi1>, vector<1x128xf32>
    %160 = arith.mulf %154, %154 : vector<1x128xf32>
    %cst_43 = arith.constant 0.0805374458 : f32
    %161 = vector.broadcast %cst_43 : f32 to vector<1x128xf32>
    %162 = arith.mulf %161, %160 : vector<1x128xf32>
    %cst_44 = arith.constant 0.138776854 : f32
    %163 = vector.broadcast %cst_44 : f32 to vector<1x128xf32>
    %164 = arith.subf %162, %163 : vector<1x128xf32>
    %165 = arith.mulf %164, %160 : vector<1x128xf32>
    %cst_45 = arith.constant 0.199777111 : f32
    %166 = vector.broadcast %cst_45 : f32 to vector<1x128xf32>
    %167 = arith.addf %165, %166 : vector<1x128xf32>
    %168 = arith.mulf %167, %160 : vector<1x128xf32>
    %cst_46 = arith.constant 0.333329499 : f32
    %169 = vector.broadcast %cst_46 : f32 to vector<1x128xf32>
    %170 = arith.subf %168, %169 : vector<1x128xf32>
    %171 = arith.mulf %170, %160 : vector<1x128xf32>
    %172 = arith.mulf %171, %154 : vector<1x128xf32>
    %173 = arith.addf %159, %172 : vector<1x128xf32>
    %174 = arith.addf %173, %154 : vector<1x128xf32>
    %cst_47 = arith.constant 0.000000e+00 : f32
    %175 = vector.broadcast %cst_47 : f32 to vector<1x128xf32>
    %176 = arith.cmpf olt, %21, %175 : vector<1x128xf32>
    %cst_48 = arith.constant 3.14159274 : f32
    %177 = vector.broadcast %cst_48 : f32 to vector<1x128xf32>
    %178 = arith.subf %177, %174 : vector<1x128xf32>
    %179 = arith.select %176, %178, %174 : vector<1x128xi1>, vector<1x128xf32>
    %cst_49 = arith.constant 0.000000e+00 : f32
    %180 = vector.broadcast %cst_49 : f32 to vector<1x128xf32>
    %181 = arith.cmpf olt, %22, %180 : vector<1x128xf32>
    %cst_50 = arith.constant 0.000000e+00 : f32
    %182 = vector.broadcast %cst_50 : f32 to vector<1x128xf32>
    %183 = arith.subf %182, %179 : vector<1x128xf32>
    %184 = arith.select %181, %183, %179 : vector<1x128xi1>, vector<1x128xf32>
    %185 = vector.extract_strided_slice %0 {offsets = [3, 0], sizes = [1, 128], strides = [1, 1]} : vector<6x128xf32> to vector<1x128xf32>
    %186 = vector.extract_strided_slice %0 {offsets = [4, 0], sizes = [1, 128], strides = [1, 1]} : vector<6x128xf32> to vector<1x128xf32>
    %187 = vector.extract_strided_slice %0 {offsets = [5, 0], sizes = [1, 128], strides = [1, 1]} : vector<6x128xf32> to vector<1x128xf32>
    %188 = math.cos %185 : vector<1x128xf32>
    %189 = math.sin %185 : vector<1x128xf32>
    %190 = math.cos %186 : vector<1x128xf32>
    %191 = math.sin %186 : vector<1x128xf32>
    %192 = math.cos %187 : vector<1x128xf32>
    %193 = math.sin %187 : vector<1x128xf32>
    %194 = arith.mulf %190, %189 : vector<1x128xf32>
    %195 = arith.mulf %190, %188 : vector<1x128xf32>
    %196 = math.absf %194 : vector<1x128xf32>
    %197 = math.absf %195 : vector<1x128xf32>
    %cst_51 = arith.constant 2.41421366 : f32
    %198 = vector.broadcast %cst_51 : f32 to vector<1x128xf32>
    %199 = arith.mulf %198, %197 : vector<1x128xf32>
    %200 = arith.cmpf ogt, %196, %199 : vector<1x128xf32>
    %cst_52 = arith.constant 0.414213568 : f32
    %201 = vector.broadcast %cst_52 : f32 to vector<1x128xf32>
    %202 = arith.mulf %201, %197 : vector<1x128xf32>
    %203 = arith.cmpf ogt, %196, %202 : vector<1x128xf32>
    %cst_53 = arith.constant 0.000000e+00 : f32
    %204 = vector.broadcast %cst_53 : f32 to vector<1x128xf32>
    %205 = arith.subf %204, %197 : vector<1x128xf32>
    %206 = arith.subf %196, %197 : vector<1x128xf32>
    %207 = arith.select %203, %206, %196 : vector<1x128xi1>, vector<1x128xf32>
    %208 = arith.select %200, %205, %207 : vector<1x128xi1>, vector<1x128xf32>
    %209 = arith.addf %196, %197 : vector<1x128xf32>
    %210 = arith.select %203, %209, %197 : vector<1x128xi1>, vector<1x128xf32>
    %211 = arith.select %200, %196, %210 : vector<1x128xi1>, vector<1x128xf32>
    %cst_54 = arith.constant 0.000000e+00 : f32
    %212 = vector.broadcast %cst_54 : f32 to vector<1x128xf32>
    %213 = arith.cmpf oeq, %211, %212 : vector<1x128xf32>
    %cst_55 = arith.constant 1.000000e+00 : f32
    %214 = vector.broadcast %cst_55 : f32 to vector<1x128xf32>
    %215 = arith.select %213, %214, %211 : vector<1x128xi1>, vector<1x128xf32>
    %216 = arith.divf %208, %215 : vector<1x128xf32>
    %cst_56 = arith.constant 0.785398185 : f32
    %cst_57 = arith.constant 0.000000e+00 : f32
    %217 = vector.broadcast %cst_56 : f32 to vector<1x128xf32>
    %218 = vector.broadcast %cst_57 : f32 to vector<1x128xf32>
    %219 = arith.select %203, %217, %218 : vector<1x128xi1>, vector<1x128xf32>
    %cst_58 = arith.constant 1.57079637 : f32
    %220 = vector.broadcast %cst_58 : f32 to vector<1x128xf32>
    %221 = arith.select %200, %220, %219 : vector<1x128xi1>, vector<1x128xf32>
    %222 = arith.mulf %216, %216 : vector<1x128xf32>
    %cst_59 = arith.constant 0.0805374458 : f32
    %223 = vector.broadcast %cst_59 : f32 to vector<1x128xf32>
    %224 = arith.mulf %223, %222 : vector<1x128xf32>
    %cst_60 = arith.constant 0.138776854 : f32
    %225 = vector.broadcast %cst_60 : f32 to vector<1x128xf32>
    %226 = arith.subf %224, %225 : vector<1x128xf32>
    %227 = arith.mulf %226, %222 : vector<1x128xf32>
    %cst_61 = arith.constant 0.199777111 : f32
    %228 = vector.broadcast %cst_61 : f32 to vector<1x128xf32>
    %229 = arith.addf %227, %228 : vector<1x128xf32>
    %230 = arith.mulf %229, %222 : vector<1x128xf32>
    %cst_62 = arith.constant 0.333329499 : f32
    %231 = vector.broadcast %cst_62 : f32 to vector<1x128xf32>
    %232 = arith.subf %230, %231 : vector<1x128xf32>
    %233 = arith.mulf %232, %222 : vector<1x128xf32>
    %234 = arith.mulf %233, %216 : vector<1x128xf32>
    %235 = arith.addf %221, %234 : vector<1x128xf32>
    %236 = arith.addf %235, %216 : vector<1x128xf32>
    %cst_63 = arith.constant 0.000000e+00 : f32
    %237 = vector.broadcast %cst_63 : f32 to vector<1x128xf32>
    %238 = arith.cmpf olt, %195, %237 : vector<1x128xf32>
    %cst_64 = arith.constant 3.14159274 : f32
    %239 = vector.broadcast %cst_64 : f32 to vector<1x128xf32>
    %240 = arith.subf %239, %236 : vector<1x128xf32>
    %241 = arith.select %238, %240, %236 : vector<1x128xi1>, vector<1x128xf32>
    %cst_65 = arith.constant 0.000000e+00 : f32
    %242 = vector.broadcast %cst_65 : f32 to vector<1x128xf32>
    %243 = arith.cmpf olt, %194, %242 : vector<1x128xf32>
    %cst_66 = arith.constant 0.000000e+00 : f32
    %244 = vector.broadcast %cst_66 : f32 to vector<1x128xf32>
    %245 = arith.subf %244, %241 : vector<1x128xf32>
    %246 = arith.select %243, %245, %241 : vector<1x128xi1>, vector<1x128xf32>
    %247 = math.absf %190 : vector<1x128xf32>
    %248 = math.absf %191 : vector<1x128xf32>
    %249 = math.absf %247 : vector<1x128xf32>
    %cst_67 = arith.constant 2.41421366 : f32
    %250 = vector.broadcast %cst_67 : f32 to vector<1x128xf32>
    %251 = arith.mulf %250, %249 : vector<1x128xf32>
    %252 = arith.cmpf ogt, %248, %251 : vector<1x128xf32>
    %cst_68 = arith.constant 0.414213568 : f32
    %253 = vector.broadcast %cst_68 : f32 to vector<1x128xf32>
    %254 = arith.mulf %253, %249 : vector<1x128xf32>
    %255 = arith.cmpf ogt, %248, %254 : vector<1x128xf32>
    %cst_69 = arith.constant 0.000000e+00 : f32
    %256 = vector.broadcast %cst_69 : f32 to vector<1x128xf32>
    %257 = arith.subf %256, %249 : vector<1x128xf32>
    %258 = arith.subf %248, %249 : vector<1x128xf32>
    %259 = arith.select %255, %258, %248 : vector<1x128xi1>, vector<1x128xf32>
    %260 = arith.select %252, %257, %259 : vector<1x128xi1>, vector<1x128xf32>
    %261 = arith.addf %248, %249 : vector<1x128xf32>
    %262 = arith.select %255, %261, %249 : vector<1x128xi1>, vector<1x128xf32>
    %263 = arith.select %252, %248, %262 : vector<1x128xi1>, vector<1x128xf32>
    %cst_70 = arith.constant 0.000000e+00 : f32
    %264 = vector.broadcast %cst_70 : f32 to vector<1x128xf32>
    %265 = arith.cmpf oeq, %263, %264 : vector<1x128xf32>
    %cst_71 = arith.constant 1.000000e+00 : f32
    %266 = vector.broadcast %cst_71 : f32 to vector<1x128xf32>
    %267 = arith.select %265, %266, %263 : vector<1x128xi1>, vector<1x128xf32>
    %268 = arith.divf %260, %267 : vector<1x128xf32>
    %cst_72 = arith.constant 0.785398185 : f32
    %cst_73 = arith.constant 0.000000e+00 : f32
    %269 = vector.broadcast %cst_72 : f32 to vector<1x128xf32>
    %270 = vector.broadcast %cst_73 : f32 to vector<1x128xf32>
    %271 = arith.select %255, %269, %270 : vector<1x128xi1>, vector<1x128xf32>
    %cst_74 = arith.constant 1.57079637 : f32
    %272 = vector.broadcast %cst_74 : f32 to vector<1x128xf32>
    %273 = arith.select %252, %272, %271 : vector<1x128xi1>, vector<1x128xf32>
    %274 = arith.mulf %268, %268 : vector<1x128xf32>
    %cst_75 = arith.constant 0.0805374458 : f32
    %275 = vector.broadcast %cst_75 : f32 to vector<1x128xf32>
    %276 = arith.mulf %275, %274 : vector<1x128xf32>
    %cst_76 = arith.constant 0.138776854 : f32
    %277 = vector.broadcast %cst_76 : f32 to vector<1x128xf32>
    %278 = arith.subf %276, %277 : vector<1x128xf32>
    %279 = arith.mulf %278, %274 : vector<1x128xf32>
    %cst_77 = arith.constant 0.199777111 : f32
    %280 = vector.broadcast %cst_77 : f32 to vector<1x128xf32>
    %281 = arith.addf %279, %280 : vector<1x128xf32>
    %282 = arith.mulf %281, %274 : vector<1x128xf32>
    %cst_78 = arith.constant 0.333329499 : f32
    %283 = vector.broadcast %cst_78 : f32 to vector<1x128xf32>
    %284 = arith.subf %282, %283 : vector<1x128xf32>
    %285 = arith.mulf %284, %274 : vector<1x128xf32>
    %286 = arith.mulf %285, %268 : vector<1x128xf32>
    %287 = arith.addf %273, %286 : vector<1x128xf32>
    %288 = arith.addf %287, %268 : vector<1x128xf32>
    %cst_79 = arith.constant 0.000000e+00 : f32
    %289 = vector.broadcast %cst_79 : f32 to vector<1x128xf32>
    %290 = arith.cmpf olt, %247, %289 : vector<1x128xf32>
    %cst_80 = arith.constant 3.14159274 : f32
    %291 = vector.broadcast %cst_80 : f32 to vector<1x128xf32>
    %292 = arith.subf %291, %288 : vector<1x128xf32>
    %293 = arith.select %290, %292, %288 : vector<1x128xi1>, vector<1x128xf32>
    %cst_81 = arith.constant 0.000000e+00 : f32
    %294 = vector.broadcast %cst_81 : f32 to vector<1x128xf32>
    %295 = arith.cmpf olt, %191, %294 : vector<1x128xf32>
    %cst_82 = arith.constant 0.000000e+00 : f32
    %296 = vector.broadcast %cst_82 : f32 to vector<1x128xf32>
    %297 = arith.subf %296, %293 : vector<1x128xf32>
    %298 = arith.select %295, %297, %293 : vector<1x128xi1>, vector<1x128xf32>
    %299 = arith.mulf %193, %190 : vector<1x128xf32>
    %300 = arith.mulf %192, %190 : vector<1x128xf32>
    %301 = math.absf %299 : vector<1x128xf32>
    %302 = math.absf %300 : vector<1x128xf32>
    %cst_83 = arith.constant 2.41421366 : f32
    %303 = vector.broadcast %cst_83 : f32 to vector<1x128xf32>
    %304 = arith.mulf %303, %302 : vector<1x128xf32>
    %305 = arith.cmpf ogt, %301, %304 : vector<1x128xf32>
    %cst_84 = arith.constant 0.414213568 : f32
    %306 = vector.broadcast %cst_84 : f32 to vector<1x128xf32>
    %307 = arith.mulf %306, %302 : vector<1x128xf32>
    %308 = arith.cmpf ogt, %301, %307 : vector<1x128xf32>
    %cst_85 = arith.constant 0.000000e+00 : f32
    %309 = vector.broadcast %cst_85 : f32 to vector<1x128xf32>
    %310 = arith.subf %309, %302 : vector<1x128xf32>
    %311 = arith.subf %301, %302 : vector<1x128xf32>
    %312 = arith.select %308, %311, %301 : vector<1x128xi1>, vector<1x128xf32>
    %313 = arith.select %305, %310, %312 : vector<1x128xi1>, vector<1x128xf32>
    %314 = arith.addf %301, %302 : vector<1x128xf32>
    %315 = arith.select %308, %314, %302 : vector<1x128xi1>, vector<1x128xf32>
    %316 = arith.select %305, %301, %315 : vector<1x128xi1>, vector<1x128xf32>
    %cst_86 = arith.constant 0.000000e+00 : f32
    %317 = vector.broadcast %cst_86 : f32 to vector<1x128xf32>
    %318 = arith.cmpf oeq, %316, %317 : vector<1x128xf32>
    %cst_87 = arith.constant 1.000000e+00 : f32
    %319 = vector.broadcast %cst_87 : f32 to vector<1x128xf32>
    %320 = arith.select %318, %319, %316 : vector<1x128xi1>, vector<1x128xf32>
    %321 = arith.divf %313, %320 : vector<1x128xf32>
    %cst_88 = arith.constant 0.785398185 : f32
    %cst_89 = arith.constant 0.000000e+00 : f32
    %322 = vector.broadcast %cst_88 : f32 to vector<1x128xf32>
    %323 = vector.broadcast %cst_89 : f32 to vector<1x128xf32>
    %324 = arith.select %308, %322, %323 : vector<1x128xi1>, vector<1x128xf32>
    %cst_90 = arith.constant 1.57079637 : f32
    %325 = vector.broadcast %cst_90 : f32 to vector<1x128xf32>
    %326 = arith.select %305, %325, %324 : vector<1x128xi1>, vector<1x128xf32>
    %327 = arith.mulf %321, %321 : vector<1x128xf32>
    %cst_91 = arith.constant 0.0805374458 : f32
    %328 = vector.broadcast %cst_91 : f32 to vector<1x128xf32>
    %329 = arith.mulf %328, %327 : vector<1x128xf32>
    %cst_92 = arith.constant 0.138776854 : f32
    %330 = vector.broadcast %cst_92 : f32 to vector<1x128xf32>
    %331 = arith.subf %329, %330 : vector<1x128xf32>
    %332 = arith.mulf %331, %327 : vector<1x128xf32>
    %cst_93 = arith.constant 0.199777111 : f32
    %333 = vector.broadcast %cst_93 : f32 to vector<1x128xf32>
    %334 = arith.addf %332, %333 : vector<1x128xf32>
    %335 = arith.mulf %334, %327 : vector<1x128xf32>
    %cst_94 = arith.constant 0.333329499 : f32
    %336 = vector.broadcast %cst_94 : f32 to vector<1x128xf32>
    %337 = arith.subf %335, %336 : vector<1x128xf32>
    %338 = arith.mulf %337, %327 : vector<1x128xf32>
    %339 = arith.mulf %338, %321 : vector<1x128xf32>
    %340 = arith.addf %326, %339 : vector<1x128xf32>
    %341 = arith.addf %340, %321 : vector<1x128xf32>
    %cst_95 = arith.constant 0.000000e+00 : f32
    %342 = vector.broadcast %cst_95 : f32 to vector<1x128xf32>
    %343 = arith.cmpf olt, %300, %342 : vector<1x128xf32>
    %cst_96 = arith.constant 3.14159274 : f32
    %344 = vector.broadcast %cst_96 : f32 to vector<1x128xf32>
    %345 = arith.subf %344, %341 : vector<1x128xf32>
    %346 = arith.select %343, %345, %341 : vector<1x128xi1>, vector<1x128xf32>
    %cst_97 = arith.constant 0.000000e+00 : f32
    %347 = vector.broadcast %cst_97 : f32 to vector<1x128xf32>
    %348 = arith.cmpf olt, %299, %347 : vector<1x128xf32>
    %cst_98 = arith.constant 0.000000e+00 : f32
    %349 = vector.broadcast %cst_98 : f32 to vector<1x128xf32>
    %350 = arith.subf %349, %346 : vector<1x128xf32>
    %351 = arith.select %348, %350, %346 : vector<1x128xi1>, vector<1x128xf32>
    %352 = arith.subf %246, %76 : vector<1x128xf32>
    %cst_99 = arith.constant 57.2957802 : f32
    %353 = vector.broadcast %cst_99 : f32 to vector<1x128xf32>
    %354 = arith.mulf %352, %353 : vector<1x128xf32>
    %355 = arith.subf %298, %133 : vector<1x128xf32>
    %cst_100 = arith.constant 57.2957802 : f32
    %356 = vector.broadcast %cst_100 : f32 to vector<1x128xf32>
    %357 = arith.mulf %355, %356 : vector<1x128xf32>
    %358 = arith.subf %351, %184 : vector<1x128xf32>
    %cst_101 = arith.constant 57.2957802 : f32
    %359 = vector.broadcast %cst_101 : f32 to vector<1x128xf32>
    %360 = arith.mulf %358, %359 : vector<1x128xf32>
    %361 = arith.mulf %354, %354 : vector<1x128xf32>
    %362 = arith.mulf %357, %357 : vector<1x128xf32>
    %363 = arith.addf %361, %362 : vector<1x128xf32>
    %364 = arith.mulf %360, %360 : vector<1x128xf32>
    %365 = arith.addf %363, %364 : vector<1x128xf32>
    %366 = math.absf %354 : vector<1x128xf32>
    %367 = math.absf %357 : vector<1x128xf32>
    %368 = arith.addf %366, %367 : vector<1x128xf32>
    %369 = math.absf %360 : vector<1x128xf32>
    %370 = arith.addf %368, %369 : vector<1x128xf32>
    %cst_102 = arith.constant 1.000000e+00 : f32
    %371 = vector.broadcast %cst_102 : f32 to vector<1x128xf32>
    %372 = arith.mulf %15, %371 : vector<1x128xf32>
    %cst_103 = arith.constant 1.000000e+00 : f32
    %373 = vector.broadcast %cst_103 : f32 to vector<1x128xf32>
    %374 = arith.mulf %365, %373 : vector<1x128xf32>
    %375 = arith.addf %372, %374 : vector<1x128xf32>
    %cst_104 = arith.constant 0.000000e+00 : f32
    %376 = vector.broadcast %cst_104 : f32 to vector<8x128xf32>
    %c0_105 = arith.constant 0 : index
    %c0_106 = arith.constant 0 : index
    %377 = vector.load %arg3[%c0_105, %c0_106] : memref<8x128xf32, #tpu.memory_space<vmem>>, vector<8x128xf32>
    tpu.vector_store %arg3[%c0_105, %c0_106], %376 {strides = array<i32>} : memref<8x128xf32, #tpu.memory_space<vmem>>, vector<8x128xf32>,
    %c0_107 = arith.constant 0 : index
    %c0_108 = arith.constant 0 : index
    %378 = vector.load %arg3[%c0_107, %c0_108] : memref<8x128xf32, #tpu.memory_space<vmem>>, vector<1x128xf32>
    tpu.vector_store %arg3[%c0_107, %c0_108], %375 {strides = array<i32>} : memref<8x128xf32, #tpu.memory_space<vmem>>, vector<1x128xf32>,
    %c1 = arith.constant 1 : index
    %c0_109 = arith.constant 0 : index
    %379 = vector.load %arg3[%c1, %c0_109] : memref<8x128xf32, #tpu.memory_space<vmem>>, vector<1x128xf32>
    tpu.vector_store %arg3[%c1, %c0_109], %15 {strides = array<i32>} : memref<8x128xf32, #tpu.memory_space<vmem>>, vector<1x128xf32>,
    %c2 = arith.constant 2 : index
    %c0_110 = arith.constant 0 : index
    %380 = vector.load %arg3[%c2, %c0_110] : memref<8x128xf32, #tpu.memory_space<vmem>>, vector<1x128xf32>
    tpu.vector_store %arg3[%c2, %c0_110], %365 {strides = array<i32>} : memref<8x128xf32, #tpu.memory_space<vmem>>, vector<1x128xf32>,
    %c3 = arith.constant 3 : index
    %c0_111 = arith.constant 0 : index
    %381 = vector.load %arg3[%c3, %c0_111] : memref<8x128xf32, #tpu.memory_space<vmem>>, vector<1x128xf32>
    tpu.vector_store %arg3[%c3, %c0_111], %20 {strides = array<i32>} : memref<8x128xf32, #tpu.memory_space<vmem>>, vector<1x128xf32>,
    %c4 = arith.constant 4 : index
    %c0_112 = arith.constant 0 : index
    %382 = vector.load %arg3[%c4, %c0_112] : memref<8x128xf32, #tpu.memory_space<vmem>>, vector<1x128xf32>
    tpu.vector_store %arg3[%c4, %c0_112], %370 {strides = array<i32>} : memref<8x128xf32, #tpu.memory_space<vmem>>, vector<1x128xf32>,
    %c0_113 = arith.constant 0 : index
    %c0_114 = arith.constant 0 : index
    %383 = vector.load %arg3[%c0_113, %c0_114] : memref<8x128xf32, #tpu.memory_space<vmem>>, vector<8x128xf32>
    %cst_115 = arith.constant dense<0.000000e+00> : vector<8xf32>
    %384 = vector.multi_reduction <add>, %383, %cst_115 [1] : vector<8x128xf32> to vector<8xf32>
    %385 = vector.shape_cast %384 : vector<8xf32> to vector<8x1xf32>
    %cst_116 = arith.constant 1.250000e-01 : f32
    %386 = vector.broadcast %cst_116 : f32 to vector<8x1xf32>
    %387 = arith.mulf %385, %386 : vector<8x1xf32>
    %388 = vector.shape_cast %387 : vector<8x1xf32> to vector<8x1xf32>
    %389 = vector.broadcast %388 : vector<8x1xf32> to vector<8x128xf32>
    %c0_117 = arith.constant 0 : index
    %c0_118 = arith.constant 0 : index
    %390 = vector.load %arg2[%c0_117, %c0_118] : memref<8x128xf32, #tpu.memory_space<vmem>>, vector<8x128xf32>
    tpu.vector_store %arg2[%c0_117, %c0_118], %389 {strides = array<i32>} : memref<8x128xf32, #tpu.memory_space<vmem>>, vector<8x128xf32>,
    return
  }
}

</mosaic_0001>

<llo_original>
// kernel: tpu_custom_call.1
$region0: #{tpu_custom_call.1}
  #allocation0 [shape = 'u32[]', space=smem, size = 0x4, offset = 0x4, fixed_abs, tag = 'smem constant byte address 0x4 - core index']
  #allocation1 [shape = 'u32[72,128]{1,0:T(1,128)}', space=vmem, size = 0x9000, scoped, tag = 'internal scratch']
  #allocation2 [shape = 'f32[8,128]{1,0:T(8,128)}', space=vmem, size = 0x1000, scoped, tag = 'scratch operand']
  %s0 = inlined_call_operand.hbm [shape: f32[6,128], index: 0, kind: input, shape index: {}]
  %s1 = inlined_call_operand.hbm [shape: f32[16,128], index: 1, kind: input, shape index: {}]
  %s2 = inlined_call_operand.hbm [shape: f32[8,128], index: 2, kind: output, shape index: {}]
  %s3 = sld [smem:[#allocation0]]
  $region26: #{tpu_custom_call.1} parent=0
    _
  %s5 = ssub.s32 1, %s3
  %s6 = scalar_select 0, %s5, %s3
  $region1: #{tpu_custom_call.1} parent=0
    #allocation3 [shape = 'u8[4096]{0}', space=vmem, size = 0x1000, scoped, tag = 'input window, operand 0, single buffered']
    #allocation4 [shape = 's32[1]{0}', space=sflag, size = 0x4, scoped, tag = 'scoped memory for tpu_custom_call.1']
    #allocation5 [shape = 's32[1]{0}', space=sflag, size = 0x4, scoped, tag = 'scoped memory for tpu_custom_call.1']
    #allocation6 [shape = 'u8[8192]{0}', space=vmem, size = 0x2000, scoped, tag = 'input window, operand 1, single buffered']
    #allocation7 [shape = 's32[1]{0}', space=sflag, size = 0x4, scoped, tag = 'scoped memory for tpu_custom_call.1']
    #allocation8 [shape = 'u8[4096]{0}', space=vmem, size = 0x1000, scoped, tag = 'output window, operand 0, single buffered']
    %7 = vsyncpa [#allocation4], 0
    %8 = vsyncpa [#allocation7], 0
    %9 = vsyncpa [#allocation5], 0
    // Predicated region
    $region2: #{tpu_custom_call.1} parent=1 // pred_check
      _
    $region3: #{tpu_custom_call.1} parent=1 // pred_check_branch
      %11 = sbr.rel (0) target = $region5
    $region4: #{tpu_custom_call.1} parent=1 // pred_region
      %13 = vsyncadd [#allocation4], 0
      %s15 = sshll.u32 %s0, 4
      %s16 = int_to_ptr.hbm [resolvable:$true] %s15
      %s17 = sshll.u32 [#allocation3], 4
      %s18 = int_to_ptr.vmem [resolvable:$true] %s17
      %20 = dma.hbm_to_vmem [thread:$0]  %s16, 128, %s18, [#allocation4]
    $region5: #{tpu_custom_call.1} parent=1 // pred_fallthru
      _
    // Predicated region
    $region6: #{tpu_custom_call.1} parent=1 // pred_check
      _
    $region7: #{tpu_custom_call.1} parent=1 // pred_check_branch
      %22 = sbr.rel (0) target = $region9
    $region8: #{tpu_custom_call.1} parent=1 // pred_region
      %24 = vsyncadd [#allocation7], 0
      %s25 = sshll.u32 %s1, 4
      %s26 = int_to_ptr.hbm [resolvable:$true] %s25
      %s27 = sshll.u32 [#allocation6], 4
      %s28 = int_to_ptr.vmem [resolvable:$true] %s27
      %33 = dma.hbm_to_vmem [thread:$0]  %s26, 256, %s28, [#allocation7], 128, 128, 8
    $region9: #{tpu_custom_call.1} parent=1 // pred_fallthru
      _
    // Predicated region
    $region10: #{tpu_custom_call.1} parent=1 // pred_check
      _
    $region11: #{tpu_custom_call.1} parent=1 // pred_check_branch
      %35 = sbr.rel (0) target = $region13
    $region12: #{tpu_custom_call.1} parent=1 // pred_region
      %37 = dma.done [#allocation4], 128
    $region13: #{tpu_custom_call.1} parent=1 // pred_fallthru
      _
    // Predicated region
    $region14: #{tpu_custom_call.1} parent=1 // pred_check
      _
    $region15: #{tpu_custom_call.1} parent=1 // pred_check_branch
      %39 = sbr.rel (0) target = $region17
    $region16: #{tpu_custom_call.1} parent=1 // pred_region
      %41 = dma.done [#allocation7], 256
    $region17: #{tpu_custom_call.1} parent=1 // pred_fallthru
      _
    %v42 = vld [vmem:[#allocation3] sm:$0x3f]
    %v43 = vld [vmem:[#allocation6] sm:$0xff]
    %v44 = vld [vmem:[#allocation6 + $0x8] sm:$0xff]
    %v46 = vrot.slane %v43, 3
    %v48 = vsub.f32 %v42, %v46
    %v49 = vrot.slane %v43, 6
    %v51 = vsub.f32 %v42, %v49
    %v53 = vrot.slane %v44, 1
    %v55 = vsub.f32 %v42, %v53
    %v56 = vmul.f32 %v48, %v48
    %v57 = vmul.f32 %v51, %v51
    %v59 = vrot.slane %v57, 1
    %v61 = vadd.f32 %v56, %v59
    %v62 = vmul.f32 %v55, %v55
    %v64 = vrot.slane %v62, 2
    %v66 = vadd.f32 %v61, %v64
    %v67 = vand.u32 2147483647, %v48
    %v68 = vand.u32 2147483647, %v51
    %v70 = vrot.slane %v68, 1
    %v72 = vadd.f32 %v67, %v70
    %v73 = vand.u32 2147483647, %v55
    %v75 = vrot.slane %v73, 2
    %v77 = vadd.f32 %v72, %v75
    %v78 = vand.u32 2147483647, %v44
    %v79 = vmul.f32 %v78, 2.4142137
    %v81 = vrot.slane %v79, 1
    %vm83 = vcmp.gt.f32.partialorder %v78, %v81
    %v84 = vmul.f32 %v78, 0.41421357
    %v86 = vrot.slane %v84, 1
    %vm88 = vcmp.gt.f32.partialorder %v78, %v86
    %v89 = vsub.f32 0.0, %v78
    %v91 = vrot.slane %v78, 1
    %v93 = vsub.f32 %v78, %v91
    %v94 = vsel %vm88, %v93, %v78
    %v96 = vrot.slane %v89, 1
    %v98 = vsel %vm83, %v96, %v94
    %v99 = vadd.f32 %v78, %v91
    %v100 = vsel %vm88, %v99, %v91
    %v101 = vsel %vm83, %v78, %v100
    %vm102 = vcmp.eq.f32.partialorder %v101, 0.0
    %v103 = vsel %vm102, 1.0, %v101
    %v104 = vrcp.pop %v103
    %v105 = vmul.f32 %v103, %v104
    %v106 = vsub.f32 1.0, %v105
    %v107 = vmul.f32 %v104, %v106
    %v108 = vadd.f32 %v104, %v107
    %vm109 = vweird.f32 %v103
    %vm110 = vweird.f32 %v104
    %vm111 = vmor %vm109, %vm110
    %v112 = vsel %vm111, %v104, %v108
    %v113 = vand.u32 2147483647, %v103
    %vm114 = vcmp.eq.f32.partialorder %v113, 8.507059e+37
    %v115 = vand.u32 %v103, 2147483648
    %v116 = vor.u32 1.1754944e-38, %v115
    %v117 = vsel %vm114, %v116, %v112
    %v118 = vmul.f32 %v98, %v117
    %v119 = vsel %vm88, 0.7853982, 0.0
    %v120 = vsel %vm83, 1.5707964, %v119
    %v121 = vmul.f32 %v118, %v118
    %v122 = vmul.f32 %v121, 0.080537446
    %v123 = vsub.f32 %v122, 0.13877685
    %v124 = vmul.f32 %v123, %v121
    %v125 = vadd.f32 %v124, 0.19977711
    %v126 = vmul.f32 %v125, %v121
    %v127 = vsub.f32 %v126, 0.3333295
    %v128 = vmul.f32 %v127, %v121
    %v129 = vmul.f32 %v128, %v118
    %v130 = vadd.f32 %v120, %v129
    %v131 = vadd.f32 %v130, %v118
    %vm132 = vcmp.lt.f32.partialorder %v44, 0.0
    %v133 = vsub.f32 3.1415927, %v131
    %v135 = vrot.slane %v133, 7
    %v138 = vrot.slane %v131, 7
    %v140 = vsel %vm132, %v135, %v138
    %v141 = vsub.f32 0.0, %v140
    %v143 = vrot.slane %v141, 1
    %v146 = vrot.slane %v140, 1
    %v148 = vsel %vm132, %v143, %v146
    %v149 = vsub.f32 0.0, %v44
    %v150 = vmul.f32 %v43, %v43
    %v152 = vrot.slane %v150, 4
    %v154 = vadd.f32 %v150, %v152
    %v155 = vrsqrt.pop %v154
    %v156 = vmul.f32 %v155, %v154
    %v157 = vmul.f32 %v156, %v155
    %v158 = vmul.f32 0.5, %v157
    %v159 = vsub.f32 1.5, %v158
    %v160 = vmul.f32 %v155, %v159
    %v161 = vmul.f32 %v154, %v160
    %vm162 = vcmp.eq.f32.partialorder %v154, inf
    %v163 = vsel %vm162, %v154, %v161
    %vm164 = vcmp.eq.f32.partialorder %v154, 0.0
    %v165 = vand.u32 %v154, 2147483648
    %v166 = vsel %vm164, %v165, %v163
    %v167 = vand.u32 2147483647, %v149
    %v168 = vand.u32 2147483647, %v166
    %v169 = vmul.f32 %v168, 2.4142137
    %vm170 = vcmp.gt.f32.partialorder %v167, %v169
    %v171 = vmul.f32 %v168, 0.41421357
    %vm172 = vcmp.gt.f32.partialorder %v167, %v171
    %v173 = vsub.f32 0.0, %v168
    %v174 = vsub.f32 %v167, %v168
    %v175 = vsel %vm172, %v174, %v167
    %v176 = vsel %vm170, %v173, %v175
    %v177 = vadd.f32 %v167, %v168
    %v178 = vsel %vm172, %v177, %v168
    %v179 = vsel %vm170, %v167, %v178
    %vm180 = vcmp.eq.f32.partialorder %v179, 0.0
    %v181 = vsel %vm180, 1.0, %v179
    %v182 = vrcp.pop %v181
    %v183 = vmul.f32 %v181, %v182
    %v184 = vsub.f32 1.0, %v183
    %v185 = vmul.f32 %v182, %v184
    %v186 = vadd.f32 %v182, %v185
    %vm187 = vweird.f32 %v181
    %vm188 = vweird.f32 %v182
    %vm189 = vmor %vm187, %vm188
    %v190 = vsel %vm189, %v182, %v186
    %v191 = vand.u32 2147483647, %v181
    %vm192 = vcmp.eq.f32.partialorder %v191, 8.507059e+37
    %v193 = vand.u32 %v181, 2147483648
    %v194 = vor.u32 1.1754944e-38, %v193
    %v195 = vsel %vm192, %v194, %v190
    %v196 = vmul.f32 %v176, %v195
    %v197 = vsel %vm172, 0.7853982, 0.0
    %v198 = vsel %vm170, 1.5707964, %v197
    %v199 = vmul.f32 %v196, %v196
    %v200 = vmul.f32 %v199, 0.080537446
    %v201 = vsub.f32 %v200, 0.13877685
    %v202 = vmul.f32 %v201, %v199
    %v203 = vadd.f32 %v202, 0.19977711
    %v204 = vmul.f32 %v203, %v199
    %v205 = vsub.f32 %v204, 0.3333295
    %v206 = vmul.f32 %v205, %v199
    %v207 = vmul.f32 %v206, %v196
    %v208 = vadd.f32 %v198, %v207
    %v209 = vadd.f32 %v208, %v196
    %vm210 = vcmp.lt.f32.partialorder %v166, 0.0
    %v211 = vsub.f32 3.1415927, %v209
    %v212 = vsel %vm210, %v211, %v209
    %vm213 = vcmp.lt.f32.partialorder %v149, 0.0
    %v214 = vsub.f32 0.0, %v212
    %v215 = vsel %vm213, %v214, %v212
    %v216 = vand.u32 2147483647, %v43
    %v217 = vmul.f32 %v216, 2.4142137
    %v219 = vrot.slane %v217, 4
    %vm221 = vcmp.gt.f32.partialorder %v216, %v219
    %v222 = vmul.f32 %v216, 0.41421357
    %v224 = vrot.slane %v222, 4
    %vm226 = vcmp.gt.f32.partialorder %v216, %v224
    %v227 = vsub.f32 0.0, %v216
    %v229 = vrot.slane %v216, 4
    %v231 = vsub.f32 %v216, %v229
    %v232 = vsel %vm226, %v231, %v216
    %v234 = vrot.slane %v227, 4
    %v236 = vsel %vm221, %v234, %v232
    %v237 = vadd.f32 %v216, %v229
    %v238 = vsel %vm226, %v237, %v229
    %v239 = vsel %vm221, %v216, %v238
    %vm240 = vcmp.eq.f32.partialorder %v239, 0.0
    %v241 = vsel %vm240, 1.0, %v239
    %v242 = vrcp.pop %v241
    %v243 = vmul.f32 %v241, %v242
    %v244 = vsub.f32 1.0, %v243
    %v245 = vmul.f32 %v242, %v244
    %v246 = vadd.f32 %v242, %v245
    %vm247 = vweird.f32 %v241
    %vm248 = vweird.f32 %v242
    %vm249 = vmor %vm247, %vm248
    %v250 = vsel %vm249, %v242, %v246
    %v251 = vand.u32 2147483647, %v241
    %vm252 = vcmp.eq.f32.partialorder %v251, 8.507059e+37
    %v253 = vand.u32 %v241, 2147483648
    %v254 = vor.u32 1.1754944e-38, %v253
    %v255 = vsel %vm252, %v254, %v250
    %v256 = vmul.f32 %v236, %v255
    %v257 = vsel %vm226, 0.7853982, 0.0
    %v258 = vsel %vm221, 1.5707964, %v257
    %v259 = vmul.f32 %v256, %v256
    %v260 = vmul.f32 %v259, 0.080537446
    %v261 = vsub.f32 %v260, 0.13877685
    %v262 = vmul.f32 %v261, %v259
    %v263 = vadd.f32 %v262, 0.19977711
    %v264 = vmul.f32 %v263, %v259
    %v265 = vsub.f32 %v264, 0.3333295
    %v266 = vmul.f32 %v265, %v259
    %v267 = vmul.f32 %v266, %v256
    %v268 = vadd.f32 %v258, %v267
    %v269 = vadd.f32 %v268, %v256
    %vm270 = vcmp.lt.f32.partialorder %v43, 0.0
    %v271 = vsub.f32 3.1415927, %v269
    %v273 = vrot.slane %v271, 4
    %v276 = vrot.slane %v269, 4
    %v278 = vsel %vm270, %v273, %v276
    %v279 = vsub.f32 0.0, %v278
    %v281 = vrot.slane %v279, 4
    %v284 = vrot.slane %v278, 4
    %v286 = vsel %vm270, %v281, %v284
    %v287 = vand.u32 2147483647, %v42
    %vm288 = vcmp.le.f32.partialorder %v287, 0.7853982
    %vm289 = vcmp.lt.s32.totalorder %v42, 0
    %v290 = vand.u32 %v42, 2139095040
    %v291 = vshrl.u32 %v290, 23
    %v292 = vsub.s32 %v291, 127
    %v293 = vand.u32 2147483647, %v42
    %v294 = vand.u32 %v293, 8388607
    %v295 = vor.u32 %v294, 8388608
    %v296 = vsub.s32 0, %v295
    %v297 = vadd.s32 %v292, 1
    %vm298 = vcmp.gt.s32.totalorder %v297, 0
    %v299 = vsel %vm298, %v297, 0
    %v300 = vshrl.u32 %v299, 5
    %v301 = vand.u32 %v299, 31
    %v302 = vsub.s32 32, %v301
    %v303 = vshrl.u32 683565275, %v302
    %v304 = vshll.u32 683565275, %v301
    %v305 = vshrl.u32 2475754826, %v302
    %v306 = vor.u32 %v304, %v305
    %v307 = vshll.u32 2475754826, %v301
    %v308 = vshrl.u32 2131351028, %v302
    %v309 = vor.u32 %v307, %v308
    %v310 = vshll.u32 2131351028, %v301
    %v311 = vshrl.u32 2102212464, %v302
    %v312 = vor.u32 %v310, %v311
    %v313 = vshll.u32 2102212464, %v301
    %v314 = vshrl.u32 920167782, %v302
    %v315 = vor.u32 %v313, %v314
    %v316 = vshll.u32 920167782, %v301
    %v317 = vshrl.u32 1326507024, %v302
    %v318 = vor.u32 %v316, %v317
    %vm319 = vcmp.lt.s32.totalorder %v300, 1
    %vm320 = vcmp.lt.s32.totalorder %v300, 2
    %vm321 = vcmp.lt.s32.totalorder %v300, 3
    %vm322 = vcmp.lt.s32.totalorder %v300, 4
    %v323 = vsel %vm319, %v303, %v306
    %v324 = vsel %vm322, %v312, 2102212464
    %v325 = vsel %vm321, %v309, %v324
    %v326 = vsel %vm320, %v323, %v325
    %v327 = vsel %vm319, %v306, %v309
    %v328 = vsel %vm322, %v315, 920167782
    %v329 = vsel %vm321, %v312, %v328
    %v330 = vsel %vm320, %v327, %v329
    %v331 = vsel %vm319, %v309, %v312
    %v332 = vsel %vm322, %v318, 1326507024
    %v333 = vsel %vm321, %v315, %v332
    %v334 = vsel %vm320, %v331, %v333
    %v335 = vshll.u32 %v295, 8
    %v336 = vand.u32 %v335, 65535
    %v337 = vshrl.u32 %v335, 16
    %v338 = vand.u32 %v334, 65535
    %v339 = vshrl.u32 %v334, 16
    %v340 = vmul.u32 %v336, %v338
    %v341 = vmul.u32 %v336, %v339
    %v342 = vmul.u32 %v337, %v338
    %v343 = vmul.u32 %v337, %v339
    %v344 = vshll.u32 %v341, 16
    %v345 = vshrl.u32 %v341, 16
    %v346 = vshll.u32 %v342, 16
    %v347 = vshrl.u32 %v342, 16
    %vm348 = vc.u32 %v340, %v344
    %v349 = vsel %vm348, 1, 0
    %v350 = vadd.s32 %v340, %v344
    %v351 = vadd.s32 %v343, %v349
    %vm352 = vc.u32 %v350, %v346
    %v353 = vsel %vm352, 1, 0
    %v354 = vadd.s32 %v350, %v346
    %v355 = vadd.s32 %v351, %v353
    %v356 = vadd.s32 %v355, %v345
    %v357 = vadd.s32 %v356, %v347
    %v358 = vand.u32 %v335, 65535
    %v359 = vshrl.u32 %v335, 16
    %v360 = vand.u32 %v330, 65535
    %v361 = vshrl.u32 %v330, 16
    %v362 = vmul.u32 %v358, %v360
    %v363 = vmul.u32 %v358, %v361
    %v364 = vmul.u32 %v359, %v360
    %v365 = vmul.u32 %v359, %v361
    %v366 = vshll.u32 %v363, 16
    %v367 = vshrl.u32 %v363, 16
    %v368 = vshll.u32 %v364, 16
    %v369 = vshrl.u32 %v364, 16
    %vm370 = vc.u32 %v362, %v366
    %v371 = vsel %vm370, 1, 0
    %v372 = vadd.s32 %v362, %v366
    %v373 = vadd.s32 %v365, %v371
    %vm374 = vc.u32 %v372, %v368
    %v375 = vsel %vm374, 1, 0
    %v376 = vadd.s32 %v372, %v368
    %v377 = vadd.s32 %v373, %v375
    %v378 = vadd.s32 %v377, %v367
    %v379 = vadd.s32 %v378, %v369
    %v380 = vmul.u32 %v335, %v326
    %v381 = vadd.s32 %v357, %v376
    %vm382 = vc.u32 %v357, %v376
    %v383 = vadd.s32 %v379, 1
    %v384 = vsel %vm382, %v383, %v379
    %v385 = vadd.s32 %v380, %v384
    %v386 = vadd.s32 %v385, 536870912
    %v387 = vshrl.u32 %v386, 30
    %v388 = vshll.u32 %v387, 30
    %v389 = vsub.s32 %v385, %v388
    %vm390 = vcmp.lt.s32.totalorder %v389, 0
    %v391 = vsub.s32 0, %v389
    %v392 = vsel %vm390, %v391, %v389
    %v393 = vclz %v392
    %v394 = vsub.s32 %v393, 2
    %vm395 = vcmp.gt.s32.totalorder 0, %v394
    %v396 = vsel %vm395, 0, %v394
    %v397 = vsub.s32 32, %v396
    %v398 = vshll.u32 %v389, %v396
    %v399 = vshrl.u32 %v381, %v397
    %v400 = vor.u32 %v398, %v399
    %v401 = vsub.s32 4294967266, %v396
    %v402 = vadd.s32 %v401, 127
    %v403 = vshll.u32 %v402, 23
    %v404 = vor.u32 4788187, %v403
    %v405 = vand.u32 2147483647, %v404
    %v407 = vcvt.s32.f32 %v400
    %v408 = vmul.f32 %v407, %v405
    %v409 = vxor.u32 %v408, 2147483648
    %v410 = vsel %vm289, %v409, %v408
    %v411 = vsub.s32 4, %v387
    %v412 = vsel %vm289, %v411, %v387
    %v413 = vsel %vm288, %v42, %v410
    %v414 = vsel %vm288, 0, %v412
    %v415 = vmul.f32 %v413, %v413
    %v416 = vmul.f32 %v415, -0.001358992
    %v417 = vadd.f32 %v416, 0.041655596
    %v418 = vmul.f32 %v415, %v417
    %v419 = vadd.f32 %v418, -0.4999988
    %v420 = vmul.f32 %v415, %v419
    %v421 = vadd.f32 1.0, %v420
    %v422 = vmul.f32 %v413, %v413
    %v423 = vmul.f32 %v422, -0.00019511016
    %v424 = vadd.f32 %v423, 0.008332121
    %v425 = vmul.f32 %v422, %v424
    %v426 = vadd.f32 %v425, -0.16666654
    %v427 = vmul.f32 %v422, %v426
    %v428 = vadd.f32 %v427, 1.0
    %v429 = vmul.f32 %v428, %v413
    %vm430 = vweird.f32 %v42
    %v431 = vand.u32 %v414, 3
    %vm432 = vcmp.lt.s32.totalorder %v431, 2
    %vm433 = vcmp.eq.s32.totalorder %v431, 0
    %v434 = vxor.u32 %v429, 2147483648
    %v435 = vsel %vm433, %v421, %v434
    %vm436 = vcmp.eq.s32.totalorder %v431, 2
    %v437 = vxor.u32 %v421, 2147483648
    %v438 = vsel %vm436, %v437, %v429
    %v439 = vsel %vm432, %v435, %v438
    %v440 = vsel %vm430, nan, %v439
    %v441 = vand.u32 2147483647, %v42
    %vm442 = vcmp.le.f32.partialorder %v441, 0.7853982
    %vm443 = vcmp.lt.s32.totalorder %v42, 0
    %v444 = vand.u32 %v42, 2139095040
    %v445 = vshrl.u32 %v444, 23
    %v446 = vsub.s32 %v445, 127
    %v447 = vand.u32 2147483647, %v42
    %v448 = vand.u32 %v447, 8388607
    %v449 = vor.u32 %v448, 8388608
    %v450 = vsub.s32 0, %v449
    %v451 = vadd.s32 %v446, 1
    %vm452 = vcmp.gt.s32.totalorder %v451, 0
    %v453 = vsel %vm452, %v451, 0
    %v454 = vshrl.u32 %v453, 5
    %v455 = vand.u32 %v453, 31
    %v456 = vsub.s32 32, %v455
    %v457 = vshrl.u32 683565275, %v456
    %v458 = vshll.u32 683565275, %v455
    %v459 = vshrl.u32 2475754826, %v456
    %v460 = vor.u32 %v458, %v459
    %v461 = vshll.u32 2475754826, %v455
    %v462 = vshrl.u32 2131351028, %v456
    %v463 = vor.u32 %v461, %v462
    %v464 = vshll.u32 2131351028, %v455
    %v465 = vshrl.u32 2102212464, %v456
    %v466 = vor.u32 %v464, %v465
    %v467 = vshll.u32 2102212464, %v455
    %v468 = vshrl.u32 920167782, %v456
    %v469 = vor.u32 %v467, %v468
    %v470 = vshll.u32 920167782, %v455
    %v471 = vshrl.u32 1326507024, %v456
    %v472 = vor.u32 %v470, %v471
    %vm473 = vcmp.lt.s32.totalorder %v454, 1
    %vm474 = vcmp.lt.s32.totalorder %v454, 2
    %vm475 = vcmp.lt.s32.totalorder %v454, 3
    %vm476 = vcmp.lt.s32.totalorder %v454, 4
    %v477 = vsel %vm473, %v457, %v460
    %v478 = vsel %vm476, %v466, 2102212464
    %v479 = vsel %vm475, %v463, %v478
    %v480 = vsel %vm474, %v477, %v479
    %v481 = vsel %vm473, %v460, %v463
    %v482 = vsel %vm476, %v469, 920167782
    %v483 = vsel %vm475, %v466, %v482
    %v484 = vsel %vm474, %v481, %v483
    %v485 = vsel %vm473, %v463, %v466
    %v486 = vsel %vm476, %v472, 1326507024
    %v487 = vsel %vm475, %v469, %v486
    %v488 = vsel %vm474, %v485, %v487
    %v489 = vshll.u32 %v449, 8
    %v490 = vand.u32 %v489, 65535
    %v491 = vshrl.u32 %v489, 16
    %v492 = vand.u32 %v488, 65535
    %v493 = vshrl.u32 %v488, 16
    %v494 = vmul.u32 %v490, %v492
    %v495 = vmul.u32 %v490, %v493
    %v496 = vmul.u32 %v491, %v492
    %v497 = vmul.u32 %v491, %v493
    %v498 = vshll.u32 %v495, 16
    %v499 = vshrl.u32 %v495, 16
    %v500 = vshll.u32 %v496, 16
    %v501 = vshrl.u32 %v496, 16
    %vm502 = vc.u32 %v494, %v498
    %v503 = vsel %vm502, 1, 0
    %v504 = vadd.s32 %v494, %v498
    %v505 = vadd.s32 %v497, %v503
    %vm506 = vc.u32 %v504, %v500
    %v507 = vsel %vm506, 1, 0
    %v508 = vadd.s32 %v504, %v500
    %v509 = vadd.s32 %v505, %v507
    %v510 = vadd.s32 %v509, %v499
    %v511 = vadd.s32 %v510, %v501
    %v512 = vand.u32 %v489, 65535
    %v513 = vshrl.u32 %v489, 16
    %v514 = vand.u32 %v484, 65535
    %v515 = vshrl.u32 %v484, 16
    %v516 = vmul.u32 %v512, %v514
    %v517 = vmul.u32 %v512, %v515
    %v518 = vmul.u32 %v513, %v514
    %v519 = vmul.u32 %v513, %v515
    %v520 = vshll.u32 %v517, 16
    %v521 = vshrl.u32 %v517, 16
    %v522 = vshll.u32 %v518, 16
    %v523 = vshrl.u32 %v518, 16
    %vm524 = vc.u32 %v516, %v520
    %v525 = vsel %vm524, 1, 0
    %v526 = vadd.s32 %v516, %v520
    %v527 = vadd.s32 %v519, %v525
    %vm528 = vc.u32 %v526, %v522
    %v529 = vsel %vm528, 1, 0
    %v530 = vadd.s32 %v526, %v522
    %v531 = vadd.s32 %v527, %v529
    %v532 = vadd.s32 %v531, %v521
    %v533 = vadd.s32 %v532, %v523
    %v534 = vmul.u32 %v489, %v480
    %v535 = vadd.s32 %v511, %v530
    %vm536 = vc.u32 %v511, %v530
    %v537 = vadd.s32 %v533, 1
    %v538 = vsel %vm536, %v537, %v533
    %v539 = vadd.s32 %v534, %v538
    %v540 = vadd.s32 %v539, 536870912
    %v541 = vshrl.u32 %v540, 30
    %v542 = vshll.u32 %v541, 30
    %v543 = vsub.s32 %v539, %v542
    %vm544 = vcmp.lt.s32.totalorder %v543, 0
    %v545 = vsub.s32 0, %v543
    %v546 = vsel %vm544, %v545, %v543
    %v547 = vclz %v546
    %v548 = vsub.s32 %v547, 2
    %vm549 = vcmp.gt.s32.totalorder 0, %v548
    %v550 = vsel %vm549, 0, %v548
    %v551 = vsub.s32 32, %v550
    %v552 = vshll.u32 %v543, %v550
    %v553 = vshrl.u32 %v535, %v551
    %v554 = vor.u32 %v552, %v553
    %v555 = vsub.s32 4294967266, %v550
    %v556 = vadd.s32 %v555, 127
    %v557 = vshll.u32 %v556, 23
    %v558 = vor.u32 4788187, %v557
    %v559 = vand.u32 2147483647, %v558
    %v561 = vcvt.s32.f32 %v554
    %v562 = vmul.f32 %v561, %v559
    %v563 = vxor.u32 %v562, 2147483648
    %v564 = vsel %vm443, %v563, %v562
    %v565 = vsub.s32 4, %v541
    %v566 = vsel %vm443, %v565, %v541
    %v567 = vsel %vm442, %v42, %v564
    %v568 = vsel %vm442, 0, %v566
    %v569 = vmul.f32 %v567, %v567
    %v570 = vmul.f32 %v569, -0.001358992
    %v571 = vadd.f32 %v570, 0.041655596
    %v572 = vmul.f32 %v569, %v571
    %v573 = vadd.f32 %v572, -0.4999988
    %v574 = vmul.f32 %v569, %v573
    %v575 = vadd.f32 1.0, %v574
    %v576 = vmul.f32 %v567, %v567
    %v577 = vmul.f32 %v576, -0.00019511016
    %v578 = vadd.f32 %v577, 0.008332121
    %v579 = vmul.f32 %v576, %v578
    %v580 = vadd.f32 %v579, -0.16666654
    %v581 = vmul.f32 %v576, %v580
    %v582 = vadd.f32 %v581, 1.0
    %v583 = vmul.f32 %v582, %v567
    %vm584 = vweird.f32 %v42
    %v585 = vadd.s32 %v568, 3
    %v586 = vand.u32 %v585, 3
    %vm587 = vcmp.lt.s32.totalorder %v586, 2
    %vm588 = vcmp.eq.s32.totalorder %v586, 0
    %v589 = vxor.u32 %v583, 2147483648
    %v590 = vsel %vm588, %v575, %v589
    %vm591 = vcmp.eq.s32.totalorder %v586, 2
    %v592 = vxor.u32 %v575, 2147483648
    %v593 = vsel %vm591, %v592, %v583
    %v594 = vsel %vm587, %v590, %v593
    %v595 = vsel %vm584, nan, %v594
    %v597 = vrot.slane %v595, 7
    %v599 = vmul.f32 %v440, %v597
    %v601 = vrot.slane %v440, 7
    %v603 = vmul.f32 %v440, %v601
    %v604 = vand.u32 2147483647, %v599
    %v605 = vand.u32 2147483647, %v603
    %v606 = vmul.f32 %v605, 2.4142137
    %vm607 = vcmp.gt.f32.partialorder %v604, %v606
    %v608 = vmul.f32 %v605, 0.41421357
    %vm609 = vcmp.gt.f32.partialorder %v604, %v608
    %v610 = vsub.f32 0.0, %v605
    %v611 = vsub.f32 %v604, %v605
    %v612 = vsel %vm609, %v611, %v604
    %v613 = vsel %vm607, %v610, %v612
    %v614 = vadd.f32 %v604, %v605
    %v615 = vsel %vm609, %v614, %v605
    %v616 = vsel %vm607, %v604, %v615
    %vm617 = vcmp.eq.f32.partialorder %v616, 0.0
    %v618 = vsel %vm617, 1.0, %v616
    %v619 = vrcp.pop %v618
    %v620 = vmul.f32 %v618, %v619
    %v621 = vsub.f32 1.0, %v620
    %v622 = vmul.f32 %v619, %v621
    %v623 = vadd.f32 %v619, %v622
    %vm624 = vweird.f32 %v618
    %vm625 = vweird.f32 %v619
    %vm626 = vmor %vm624, %vm625
    %v627 = vsel %vm626, %v619, %v623
    %v628 = vand.u32 2147483647, %v618
    %vm629 = vcmp.eq.f32.partialorder %v628, 8.507059e+37
    %v630 = vand.u32 %v618, 2147483648
    %v631 = vor.u32 1.1754944e-38, %v630
    %v632 = vsel %vm629, %v631, %v627
    %v633 = vmul.f32 %v613, %v632
    %v634 = vsel %vm609, 0.7853982, 0.0
    %v635 = vsel %vm607, 1.5707964, %v634
    %v636 = vmul.f32 %v633, %v633
    %v637 = vmul.f32 %v636, 0.080537446
    %v638 = vsub.f32 %v637, 0.13877685
    %v639 = vmul.f32 %v638, %v636
    %v640 = vadd.f32 %v639, 0.19977711
    %v641 = vmul.f32 %v640, %v636
    %v642 = vsub.f32 %v641, 0.3333295
    %v643 = vmul.f32 %v642, %v636
    %v644 = vmul.f32 %v643, %v633
    %v645 = vadd.f32 %v635, %v644
    %v646 = vadd.f32 %v645, %v633
    %vm647 = vcmp.lt.f32.partialorder %v603, 0.0
    %v648 = vsub.f32 3.1415927, %v646
    %v649 = vsel %vm647, %v648, %v646
    %vm650 = vcmp.lt.f32.partialorder %v599, 0.0
    %v651 = vsub.f32 0.0, %v649
    %v652 = vsel %vm650, %v651, %v649
    %v653 = vand.u32 2147483647, %v440
    %v654 = vand.u32 2147483647, %v595
    %v655 = vand.u32 2147483647, %v653
    %v656 = vmul.f32 %v655, 2.4142137
    %vm657 = vcmp.gt.f32.partialorder %v654, %v656
    %v658 = vmul.f32 %v655, 0.41421357
    %vm659 = vcmp.gt.f32.partialorder %v654, %v658
    %v660 = vsub.f32 0.0, %v655
    %v661 = vsub.f32 %v654, %v655
    %v662 = vsel %vm659, %v661, %v654
    %v663 = vsel %vm657, %v660, %v662
    %v664 = vadd.f32 %v654, %v655
    %v665 = vsel %vm659, %v664, %v655
    %v666 = vsel %vm657, %v654, %v665
    %vm667 = vcmp.eq.f32.partialorder %v666, 0.0
    %v668 = vsel %vm667, 1.0, %v666
    %v669 = vrcp.pop %v668
    %v670 = vmul.f32 %v668, %v669
    %v671 = vsub.f32 1.0, %v670
    %v672 = vmul.f32 %v669, %v671
    %v673 = vadd.f32 %v669, %v672
    %vm674 = vweird.f32 %v668
    %vm675 = vweird.f32 %v669
    %vm676 = vmor %vm674, %vm675
    %v677 = vsel %vm676, %v669, %v673
    %v678 = vand.u32 2147483647, %v668
    %vm679 = vcmp.eq.f32.partialorder %v678, 8.507059e+37
    %v680 = vand.u32 %v668, 2147483648
    %v681 = vor.u32 1.1754944e-38, %v680
    %v682 = vsel %vm679, %v681, %v677
    %v683 = vmul.f32 %v663, %v682
    %v684 = vsel %vm659, 0.7853982, 0.0
    %v685 = vsel %vm657, 1.5707964, %v684
    %v686 = vmul.f32 %v683, %v683
    %v687 = vmul.f32 %v686, 0.080537446
    %v688 = vsub.f32 %v687, 0.13877685
    %v689 = vmul.f32 %v688, %v686
    %v690 = vadd.f32 %v689, 0.19977711
    %v691 = vmul.f32 %v690, %v686
    %v692 = vsub.f32 %v691, 0.3333295
    %v693 = vmul.f32 %v692, %v686
    %v694 = vmul.f32 %v693, %v683
    %v695 = vadd.f32 %v685, %v694
    %v696 = vadd.f32 %v695, %v683
    %vm697 = vcmp.lt.f32.partialorder %v653, 0.0
    %v698 = vsub.f32 3.1415927, %v696
    %v699 = vsel %vm697, %v698, %v696
    %vm700 = vcmp.lt.f32.partialorder %v595, 0.0
    %v701 = vsub.f32 0.0, %v699
    %v702 = vsel %vm700, %v701, %v699
    %v703 = vmul.f32 %v595, %v601
    %v704 = vand.u32 2147483647, %v703
    %vm705 = vcmp.gt.f32.partialorder %v704, %v606
    %vm706 = vcmp.gt.f32.partialorder %v704, %v608
    %v707 = vsub.f32 %v704, %v605
    %v708 = vsel %vm706, %v707, %v704
    %v709 = vsel %vm705, %v610, %v708
    %v710 = vadd.f32 %v704, %v605
    %v711 = vsel %vm706, %v710, %v605
    %v712 = vsel %vm705, %v704, %v711
    %vm713 = vcmp.eq.f32.partialorder %v712, 0.0
    %v714 = vsel %vm713, 1.0, %v712
    %v715 = vrcp.pop %v714
    %v716 = vmul.f32 %v714, %v715
    %v717 = vsub.f32 1.0, %v716
    %v718 = vmul.f32 %v715, %v717
    %v719 = vadd.f32 %v715, %v718
    %vm720 = vweird.f32 %v714
    %vm721 = vweird.f32 %v715
    %vm722 = vmor %vm720, %vm721
    %v723 = vsel %vm722, %v715, %v719
    %v724 = vand.u32 2147483647, %v714
    %vm725 = vcmp.eq.f32.partialorder %v724, 8.507059e+37
    %v726 = vand.u32 %v714, 2147483648
    %v727 = vor.u32 1.1754944e-38, %v726
    %v728 = vsel %vm725, %v727, %v723
    %v729 = vmul.f32 %v709, %v728
    %v730 = vsel %vm706, 0.7853982, 0.0
    %v731 = vsel %vm705, 1.5707964, %v730
    %v732 = vmul.f32 %v729, %v729
    %v733 = vmul.f32 %v732, 0.080537446
    %v734 = vsub.f32 %v733, 0.13877685
    %v735 = vmul.f32 %v734, %v732
    %v736 = vadd.f32 %v735, 0.19977711
    %v737 = vmul.f32 %v736, %v732
    %v738 = vsub.f32 %v737, 0.3333295
    %v739 = vmul.f32 %v738, %v732
    %v740 = vmul.f32 %v739, %v729
    %v741 = vadd.f32 %v731, %v740
    %v742 = vadd.f32 %v741, %v729
    %v743 = vsub.f32 3.1415927, %v742
    %v744 = vsel %vm647, %v743, %v742
    %vm745 = vcmp.lt.f32.partialorder %v703, 0.0
    %v746 = vsub.f32 0.0, %v744
    %v747 = vsel %vm745, %v746, %v744
    %v749 = vrot.slane %v148, 5
    %v751 = vsub.f32 %v652, %v749
    %v752 = vmul.f32 %v751, 57.29578
    %v754 = vrot.slane %v215, 4
    %v756 = vsub.f32 %v702, %v754
    %v757 = vmul.f32 %v756, 57.29578
    %v759 = vrot.slane %v286, 7
    %v761 = vsub.f32 %v747, %v759
    %v762 = vmul.f32 %v761, 57.29578
    %v763 = vmul.f32 %v752, %v752
    %v764 = vmul.f32 %v757, %v757
    %v765 = vadd.f32 %v763, %v764
    %v766 = vmul.f32 %v762, %v762
    %v768 = vrot.slane %v766, 1
    %v770 = vadd.f32 %v765, %v768
    %v771 = vand.u32 2147483647, %v752
    %v772 = vand.u32 2147483647, %v757
    %v773 = vadd.f32 %v771, %v772
    %v774 = vand.u32 2147483647, %v762
    %v776 = vrot.slane %v774, 1
    %v778 = vadd.f32 %v773, %v776
    %v780 = vrot.slane %v770, 4
    %v782 = vadd.f32 %v66, %v780
    %783 = vst [vmem:[#allocation2] sm:$0xff] 0.0
    %784 = vst [vmem:[#allocation2] sm:$0x1] %v782
    %785 = vst [vmem:[#allocation2 + $0x1] sm:$0x1] %v66
    %786 = vst [vmem:[#allocation2 - $0x2] sm:$0x10] %v770
    %787 = vst [vmem:[#allocation2 + $0x3] sm:$0x1] %v77
    %788 = vst [vmem:[#allocation2] sm:$0x10] %v778
    %v789 = vld [vmem:[#allocation2] sm:$0xff]
    %790 = vadd.xlane.f32.xlu0 %v789
    %v791 = vpop.xlane.xlu0 %790
    %v792 = vmul.f32 %v791, 0.125
    %793 = vst [vmem:[#allocation8] sm:$0xff] %v792
    // Predicated region
    $region18: #{tpu_custom_call.1} parent=1 // pred_check
      _
    $region19: #{tpu_custom_call.1} parent=1 // pred_check_branch
      %795 = sbr.rel (0) target = $region21
    $region20: #{tpu_custom_call.1} parent=1 // pred_region
      %797 = vsyncadd [#allocation5], 0
      %s799 = sshll.u32 [#allocation8], 4
      %s800 = int_to_ptr.vmem [resolvable:$true] %s799
      %s801 = sshll.u32 %s2, 4
      %s802 = int_to_ptr.hbm [resolvable:$true] %s801
      %804 = dma.vmem_to_hbm [thread:$0]  %s800, 128, %s802, [#allocation5]
    $region21: #{tpu_custom_call.1} parent=1 // pred_fallthru
      _
    // Predicated region
    $region22: #{tpu_custom_call.1} parent=1 // pred_check
      _
    $region23: #{tpu_custom_call.1} parent=1 // pred_check_branch
      %806 = sbr.rel (0) target = $region25
    $region24: #{tpu_custom_call.1} parent=1 // pred_region
      %808 = dma.done [#allocation5], 128
    $region25: #{tpu_custom_call.1} parent=1 // pred_fallthru
      _
    %809 = vsyncpa [#allocation4], 1
    %810 = vsyncpa [#allocation7], 1
    %811 = vsyncpa [#allocation5], 1

</llo_original>
